<compile_context>
chip_gen: v6e
topology: v6e:2x2x1
jax: 0.10.0
libtpu: 0.0.40
codegen_flags: <defaults>
</compile_context>

<pallas_src>
import jax
import jax.numpy as jnp
from jax.experimental import pallas as pl
from jax.experimental.pallas import tpu as pltpu


_SMALL_BYTES = 1 << 20  # below this, any kernel launch is pure overhead


def _flatten_copy_kernel(x_ref, o_ref):
    # Pure data movement: copy the current (row_tile, col_tile) tile.
    o_ref[...] = x_ref[...]


def _pick_row_tile(n):
    # Small batches: one full block (full array dim satisfies the (8,128) rule).
    # Large batches: sublane-aligned 256-row tiles (>=2 row blocks lets the two
    # v7x TensorCores each take a share of the "parallel" row axis).
    if n <= 256:
        return n
    return 256


def _pick_col_tile(d):
    # Lane-dense tiles: the full dim if it fits, otherwise the largest
    # 128-multiple divisor <= 4096 (avoids ragged masked-store edge blocks);
    # fall back to 4096 with cdiv padding if d has no such divisor.
    if d <= 4096:
        return d
    for t in (4096, 2048, 1024, 512, 256, 128):
        if d % t == 0:
            return t
    return 4096


def _flatten_pallas(x_flat):
    """Tiled, input/output-aliased Pallas pass-through of an (n, d) array."""
    n, d = x_flat.shape
    row_tile = _pick_row_tile(n)
    col_tile = _pick_col_tile(d)
    grid = (pl.cdiv(n, row_tile), pl.cdiv(d, col_tile))
    itemsize = jnp.dtype(x_flat.dtype).itemsize

    return pl.pallas_call(
        _flatten_copy_kernel,
        out_shape=jax.ShapeDtypeStruct((n, d), x_flat.dtype),
        grid_spec=pl.GridSpec(
            grid=grid,
            in_specs=[pl.BlockSpec((row_tile, col_tile), lambda i, j: (i, j))],
            out_specs=pl.BlockSpec((row_tile, col_tile), lambda i, j: (i, j)),
        ),
        # Output aliases the input buffer: no second HBM allocation for what is
        # semantically a metadata-only reshape.
        input_output_aliases={0: 0},
        cost_estimate=pl.CostEstimate(
            flops=0, transcendentals=0, bytes_accessed=2 * n * d * itemsize),
        compiler_params=pltpu.CompilerParams(
            dimension_semantics=("parallel", "parallel"),
        ),
    )(x_flat)


def two_mlp_head_forward(x, params=None, force_pallas=False):
    """TwoMLPHead.forward per the given spec: x.flatten(start_dim=1).

    x: (N, C, H, W) array (NCHW, matching PyTorch).
    params: unused by forward() (kept for parity with the module __init__).
    force_pallas: route the flattened tensor through the tiled Pallas
        pass-through (used by the self-test); default is the metadata-only
        reshape, which is the recommended (zero-HBM-traffic) path.
    Returns: (N, C*H*W) array, identical element order to torch.flatten.
    """
    del params  # forward() never touches fc6/fc7
    n = x.shape[0]
    d = 1
    for s in x.shape[1:]:
        d *= s

    # The real work of this forward: a metadata-only row-major flatten.
    x_flat = x.reshape(n, d)

    if not force_pallas:
        # Per perf review: never turn a free reshape into an HBM round trip.
        # (Also short-circuits tiny inputs like the self-test's 8 KiB tensor.)
        return x_flat

    nbytes = n * d * jnp.dtype(x_flat.dtype).itemsize
    del nbytes  # kernel path is explicit; threshold kept only for reference
    return _flatten_pallas(x_flat)


def init_two_mlp_head_params(key, in_channels, representation_size,
                             dtype=jnp.float32):
    """Parameters matching the nn.Linear shapes from __init__.

    Unused by forward() (it only flattens); created for constructor parity.
    """
    k1, k2, k3, k4 = jax.random.split(key, 4)
    return {
        "fc6_w": jax.random.normal(k1, (representation_size, in_channels),
                                   dtype) * 0.01,
        "fc6_b": jax.random.normal(k2, (representation_size,), dtype) * 0.01,
        "fc7_w": jax.random.normal(k3, (representation_size,
                                        representation_size), dtype) * 0.01,
        "fc7_b": jax.random.normal(k4, (representation_size,), dtype) * 0.01,
    }


if __name__ == "__main__":
    key = jax.random.PRNGKey(0)
    k_x, k_p = jax.random.split(key)

    # Small shapes: batch=2, channels=4, spatial=16x16 -> in_channels = 1024.
    N, C, H, W = 2, 4, 16, 16
    in_channels = C * H * W
    representation_size = 32

    x = jax.random.normal(k_x, (N, C, H, W), jnp.float32)
    params = init_two_mlp_head_params(k_p, in_channels, representation_size)

    # Reference: torch.flatten(start_dim=1) is a row-major collapse, identical
    # to this reshape. Computed before any (aliased) kernel call.
    ref = x.reshape(N, -1)

    # Default (recommended) path: metadata-only flatten, no kernel emitted.
    out_default = jax.block_until_ready(two_mlp_head_forward(x, params))
    assert out_default.shape == (N, in_channels)
    assert jnp.allclose(out_default, ref)

    # Exercise the Pallas path once (tiled, input/output-aliased pass-through).
    out_kernel = jax.block_until_ready(
        two_mlp_head_forward(x, params, force_pallas=True))
    assert out_kernel.shape == (N, in_channels)
    assert jnp.allclose(out_kernel, ref)

    print("KERNEL_OK")
</pallas_src>

<mosaic_0001>
module attributes {stable_mosaic.version = 11 : i64} {
  func.func @_flatten_copy_kernel(%arg0: i32, %arg1: i32, %arg2: memref<2x1024xf32, #tpu.memory_space<vmem>>, %arg3: memref<2x1024xf32, #tpu.memory_space<vmem>>) attributes {dimension_semantics = [#tpu.dimension_semantics<parallel>, #tpu.dimension_semantics<parallel>], iteration_bounds = array<i64: 1, 1>, scalar_prefetch = 0 : i64, scratch_operands = 0 : i64, tpu.core_type = #tpu.core_type<tc>, window_params = [{transform_indices = @transform_0, window_bounds = array<i64: 2, 1024>}, {transform_indices = @transform_1, window_bounds = array<i64: 2, 1024>}]} {
    %c0 = arith.constant 0 : index
    %c0_0 = arith.constant 0 : index
    %0 = vector.load %arg2[%c0, %c0_0] : memref<2x1024xf32, #tpu.memory_space<vmem>>, vector<2x1024xf32>
    %c0_1 = arith.constant 0 : index
    %c0_2 = arith.constant 0 : index
    %1 = vector.load %arg3[%c0_1, %c0_2] : memref<2x1024xf32, #tpu.memory_space<vmem>>, vector<2x1024xf32>
    tpu.vector_store %arg3[%c0_1, %c0_2], %0 {strides = array<i32>} : memref<2x1024xf32, #tpu.memory_space<vmem>>, vector<2x1024xf32>,
    return
  }
  func.func @transform_0(%arg0: i32, %arg1: i32) -> (i32, i32) {
    %c0_i32 = arith.constant 0 : i32
    return %arg0, %arg1 : i32, i32
  }
  func.func @transform_1(%arg0: i32, %arg1: i32) -> (i32, i32) {
    %c0_i32 = arith.constant 0 : i32
    return %arg0, %arg1 : i32, i32
  }
}

</mosaic_0001>

<llo_original>
// kernel: tpu_custom_call.1
$region0: #{tpu_custom_call.1}
  #allocation0 [shape = 'u32[]', space=smem, size = 0x4, offset = 0x4, fixed_abs, tag = 'smem constant byte address 0x4 - core index']
  #allocation1 [shape = 'u32[144,128]{1,0:T(1,128)}', space=vmem, size = 0x12000, scoped, tag = 'internal scratch']
  %s0 = inlined_call_operand.hbm [shape: f32[2,1024], index: 0, kind: input, shape index: {}, may-alias: {0,1}]
  %s1 = inlined_call_operand.hbm [shape: f32[2,1024], index: 1, kind: output, shape index: {}, may-alias: {0,1}]
  %s2 = sld [smem:[#allocation0]]
  $region18: #{tpu_custom_call.1} parent=0
    _
  %s4 = ssub.s32 1, %s2
  %s5 = scalar_select 0, %s4, %s2
  $region1: #{tpu_custom_call.1} parent=0
    #allocation2 [shape = 'u8[8192]{0}', space=vmem, size = 0x2000, scoped, tag = 'input window, operand 0, single buffered']
    #allocation3 [shape = 's32[1]{0}', space=sflag, size = 0x4, scoped, tag = 'scoped memory for tpu_custom_call.1']
    #allocation4 [shape = 's32[1]{0}', space=sflag, size = 0x4, scoped, tag = 'scoped memory for tpu_custom_call.1']
    #allocation5 [shape = 'u8[8192]{0}', space=vmem, size = 0x2000, scoped, tag = 'output window, operand 0, single buffered']
    %6 = vsyncpa [#allocation3], 0
    %7 = vsyncpa [#allocation4], 0
    // Predicated region
    $region2: #{tpu_custom_call.1} parent=1 // pred_check
      _
    $region3: #{tpu_custom_call.1} parent=1 // pred_check_branch
      %9 = sbr.rel (0) target = $region5
    $region4: #{tpu_custom_call.1} parent=1 // pred_region
      %s11 = ssub.s32 256, 256
      %12 = vsyncadd [#allocation3], %s11
      %s14 = sshll.u32 [#allocation2], 4
      %s15 = int_to_ptr.vmem [resolvable:$true] %s14
      %17 = dma.hbm_to_vmem [thread:$0]  %s0, 256, %s15, [#allocation3]
    $region5: #{tpu_custom_call.1} parent=1 // pred_fallthru
      _
    // Predicated region
    $region6: #{tpu_custom_call.1} parent=1 // pred_check
      _
    $region7: #{tpu_custom_call.1} parent=1 // pred_check_branch
      %19 = sbr.rel (0) target = $region9
    $region8: #{tpu_custom_call.1} parent=1 // pred_region
      %20 = dma.done [#allocation3], 256
    $region9: #{tpu_custom_call.1} parent=1 // pred_fallthru
      _
    %v21 = vld [vmem:[#allocation2] sm:$0xff]
    %v22 = vld [vmem:[#allocation2 + $0x8] sm:$0xff]
    %23 = vst [vmem:[#allocation5] sm:$0xff] %v21
    %24 = vst [vmem:[#allocation5 + $0x8] sm:$0xff] %v22
    // Predicated region
    $region10: #{tpu_custom_call.1} parent=1 // pred_check
      _
    $region11: #{tpu_custom_call.1} parent=1 // pred_check_branch
      %26 = sbr.rel (0) target = $region13
    $region12: #{tpu_custom_call.1} parent=1 // pred_region
      %s28 = ssub.s32 256, 256
      %29 = vsyncadd [#allocation4], %s28
      %s31 = sshll.u32 [#allocation5], 4
      %s32 = int_to_ptr.vmem [resolvable:$true] %s31
      %34 = dma.vmem_to_hbm [thread:$0]  %s32, 256, %s1, [#allocation4]
    $region13: #{tpu_custom_call.1} parent=1 // pred_fallthru
      _
    // Predicated region
    $region14: #{tpu_custom_call.1} parent=1 // pred_check
      _
    $region15: #{tpu_custom_call.1} parent=1 // pred_check_branch
      %36 = sbr.rel (0) target = $region17
    $region16: #{tpu_custom_call.1} parent=1 // pred_region
      %37 = dma.done [#allocation4], 256
    $region17: #{tpu_custom_call.1} parent=1 // pred_fallthru
      _
    %38 = vsyncpa [#allocation3], 1
    %39 = vsyncpa [#allocation4], 1

</llo_original>
